<compile_context>
chip_gen: v5e
topology: v5e:2x2
jax: 0.10.0
libtpu: 0.0.40
codegen_flags: <defaults>
</compile_context>

<pallas_src>
import math

import jax
import jax.numpy as jnp
from jax.experimental import pallas as pl
from jax.experimental.pallas import tpu as pltpu


# ---------------------------------------------------------------------------
# Kernel: one (row-tile, graph) grid cell = masked GEMM.
#   a_prime = SD_tile * A_tile              (elementwise; A in {0,1})
#   out     = a_prime @ support + bias      (bf16 x bf16 MXU, f32 accumulate)
# ---------------------------------------------------------------------------
def gcn_dropedge_kernel(sd_ref, a_ref, sup_ref, b_ref, o_ref):
    # Mask multiply in storage dtype (bf16 product is exact because A is {0,1});
    # downcast to bf16 so the matmul is a single-pass MXU op on all generations.
    a_prime = (sd_ref[...] * a_ref[...]).astype(jnp.bfloat16)
    out = jnp.dot(a_prime, sup_ref[...], preferred_element_type=jnp.float32)
    o_ref[...] = (out + b_ref[...]).astype(o_ref.dtype)


# ---------------------------------------------------------------------------
# Host-side helpers
# ---------------------------------------------------------------------------
def fold_targeted_dropout(S, key, num_docs, targeted_drop=0.1):
    """Return SD = S * D with the torch-style targeted dropout mask folded in.

    D is Dropout(p) on the doc-doc (d x d) block and ones elsewhere, so only
    the d x d block of S is touched; no full (n, n) D is ever materialized or
    DMAed to the kernel.
    """
    if targeted_drop <= 0.0:
        return S
    d = num_docs
    keep = jax.random.bernoulli(key, p=1.0 - targeted_drop, shape=(d, d))
    doc = keep.astype(S.dtype) / (1.0 - targeted_drop)
    return S.at[:d, :d].multiply(doc)


def _vmem_capacity_bytes():
    """Best-effort physical VMEM query; conservative (v7x = 64 MiB) fallback."""
    try:
        info = pltpu.get_tpu_info()
        for attr in ("vmem_capacity_bytes", "vmem_size_bytes", "vmem_bytes"):
            val = getattr(info, attr, None)
            if val:
                return int(val)
    except Exception:
        pass
    return 64 * 1024 * 1024


def _tile_footprint_bytes(tm, n, o_pad, adj_bytes):
    """Exact per-step VMEM residency for a given row tile."""
    dbl_inputs = 2 * (2 * tm * n * adj_bytes      # A + SD tiles (double-buffered)
                      + n * o_pad * 2             # support (bf16)
                      + o_pad * 4)                # bias
    a_prime = tm * n * 2                          # materialized bf16 intermediate
    dbl_out = 2 * tm * o_pad * 4                  # output tile (double-buffered)
    return dbl_inputs + a_prime + dbl_out


def _pick_row_tile(n, o_pad, adj_bytes, vmem_cap, row_tile=None):
    if row_tile is not None:
        assert n % row_tile == 0, "n must be divisible by row_tile"
        return row_tile
    # Generation-aware tile ceiling: bigger on 128 MiB VMEM parts (v5e/v6e),
    # smaller on v7x's 64 MiB so double-buffered DMA always has headroom.
    if vmem_cap >= 96 * 1024 * 1024:
        tm_max, budget = 1024, int(0.55 * vmem_cap)
    else:
        tm_max, budget = 512, int(0.45 * vmem_cap)
    if n <= tm_max:
        return n
    # Largest divisor of n that is a multiple of 8, <= tm_max, and fits budget.
    for tm in range(min(tm_max, n), 7, -1):
        if n % tm == 0 and tm % 8 == 0 and \
                _tile_footprint_bytes(tm, n, o_pad, adj_bytes) <= budget:
            return tm
    # TODO(synk): ragged n (no 8-multiple divisor) would need host-side row
    # padding; fall back to whole-matrix rows.
    return n


def gcn_dropedge_forward(A, SD, X, W, bias, *, row_tile=None):
    """Fused Pallas forward: out[b] = (SD * A[b]) @ (X[b] @ W) + bias.

    A : (B, n, n) or (n, n)   adjacency in {0, 1}; pass a cached bf16 copy if
                              reused across layers / steps (f32 also accepted)
    SD: (n, n)                learnable S with the dropout mask pre-folded
                              (same caching advice as A)
    X : (B, n, e) or (n, e)   node features
    W : (e, o)     bias : (o,) or (1, o)
    """
    single = A.ndim == 2
    if single:
        A, X = A[None], X[None]
    B, n, _ = A.shape
    e, o = W.shape
    o_pad = ((o + 127) // 128) * 128              # lane-dense output width

    # support = X @ W is tiny -> plain XLA GEMM outside the kernel, cast to
    # bf16 and zero-padded to 128 lanes (unmasked lane-dense MXU columns).
    support = jnp.einsum("bne,eo->bno", X.astype(jnp.float32),
                         W.astype(jnp.float32))
    support_pad = jnp.zeros((B, n, o_pad), jnp.bfloat16).at[..., :o].set(
        support.astype(jnp.bfloat16))
    b_pad = jnp.zeros((1, o_pad), jnp.float32).at[0, :o].set(
        bias.astype(jnp.float32).reshape(-1))

    adj_bytes = max(jnp.dtype(A.dtype).itemsize, jnp.dtype(SD.dtype).itemsize)
    vmem_cap = _vmem_capacity_bytes()
    tm = _pick_row_tile(n, o_pad, adj_bytes, vmem_cap, row_tile)

    footprint = _tile_footprint_bytes(tm, n, o_pad, adj_bytes)
    vmem_limit = int(min(max(int(1.5 * footprint) + (2 << 20), 16 << 20),
                         int(0.75 * vmem_cap)))

    # Grid: row-tile OUTER, batch INNER -> SD's block index is constant along
    # the inner axis, so Pallas reuses its VMEM buffer across graphs instead
    # of re-DMAing it per (tile, graph).
    grid = (n // tm, B)

    cost = pl.CostEstimate(
        flops=int(2 * B * n * n * o_pad + B * n * n),
        transcendentals=0,
        bytes_accessed=int(B * n * n * jnp.dtype(A.dtype).itemsize      # A
                           + n * n * jnp.dtype(SD.dtype).itemsize       # SD (reused)
                           + B * (n // tm) * n * o_pad * 2              # support
                           + B * n * o_pad * 4))                        # out

    out = pl.pallas_call(
        gcn_dropedge_kernel,
        out_shape=jax.ShapeDtypeStruct((B, n, o_pad), jnp.float32),
        grid=grid,
        in_specs=[
            pl.BlockSpec((tm, n),          lambda i, b: (i, 0)),      # SD
            pl.BlockSpec((None, tm, n),    lambda i, b: (b, i, 0)),   # A
            pl.BlockSpec((None, n, o_pad), lambda i, b: (b, 0, 0)),   # support
            pl.BlockSpec((1, o_pad),       lambda i, b: (0, 0)),      # bias
        ],
        out_specs=pl.BlockSpec((None, tm, o_pad), lambda i, b: (b, i, 0)),
        compiler_params=pltpu.CompilerParams(
            dimension_semantics=("parallel", "parallel"),
            vmem_limit_bytes=vmem_limit),
        cost_estimate=cost,
    )(SD, A, support_pad, b_pad)

    out = out[..., :o]
    if single:
        out = out[0]
    return out


if __name__ == "__main__":
    # Small shapes consistent with the module; batch of 2 graphs per call.
    num_docs, num_tokens = 8, 24
    n = num_docs + num_tokens          # 32 graph nodes
    emb_dim, out_dim = 32, 2
    targeted_drop = 0.1
    batch = 2

    key = jax.random.PRNGKey(0)
    k_w, k_b, k_s, k_x, k_a, k_d = jax.random.split(key, 6)

    # Deterministic parameter init mirroring reset_parameters():
    stdv = 1.0 / math.sqrt(out_dim)
    W = jax.random.uniform(k_w, (emb_dim, out_dim), jnp.float32, -stdv, stdv)
    bias = jax.random.uniform(k_b, (out_dim,), jnp.float32, -stdv, stdv)
    xav = math.sqrt(6.0 / (n + n))                 # xavier_uniform_ for S
    S = jax.random.uniform(k_s, (n, n), jnp.float32, -xav, xav)

    # Example inputs: a small batch of graphs sharing S / W / bias.
    X = jax.random.normal(k_x, (batch, n, emb_dim), jnp.float32)
    A = (jax.random.uniform(k_a, (batch, n, n)) > 0.5).astype(jnp.float32)

    # Targeted dropout folded into S (one draw per forward, as in the module).
    SD = fold_targeted_dropout(S, k_d, num_docs, targeted_drop)

    # bf16 copies of the O(n^2) operands, created ONCE and reused across
    # layers / steps (per review: the host-side cast only pays off if cached).
    A_b = jax.block_until_ready(A.astype(jnp.bfloat16))
    SD_b = jax.block_until_ready(SD.astype(jnp.bfloat16))

    out = gcn_dropedge_forward(A_b, SD_b, X, W, bias)
    out = jax.block_until_ready(out)
    assert out.shape == (batch, n, out_dim)

    # (1) bf16-mirrored reference: matches kernel numerics (bf16 adjacency
    #     storage, bf16 support) up to f32 accumulation order.
    a_m = A_b.astype(jnp.float32)
    sd_m = SD_b.astype(jnp.float32)
    a_prime_m = sd_m[None] * a_m                   # exact: A in {0,1}
    support_m = jnp.einsum("bne,eo->bno", X, W
                           ).astype(jnp.bfloat16).astype(jnp.float32)
    ref_m = jnp.einsum("bij,bjo->bio", a_prime_m, support_m) + bias[None, None, :]
    assert jnp.allclose(out, ref_m, atol=1e-2, rtol=1e-2)

    # (2) full-f32 module semantics: loose tolerance accounts for the bf16
    #     storage of the adjacency operands (review-approved trade-off).
    ref = jnp.einsum("bij,bjo->bio", SD[None] * A,
                     jnp.einsum("bne,eo->bno", X, W)) + bias[None, None, :]
    assert jnp.allclose(out, ref, atol=5e-2, rtol=5e-2)

    print("KERNEL_OK")
</pallas_src>

<mosaic_0001>
module attributes {stable_mosaic.version = 11 : i64} {
  func.func @gcn_dropedge_kernel(%arg0: i32, %arg1: i32, %arg2: memref<32x32xbf16, #tpu.memory_space<vmem>>, %arg3: memref<1x32x32xbf16, #tpu.memory_space<vmem>>, %arg4: memref<1x32x128xbf16, #tpu.memory_space<vmem>>, %arg5: memref<1x128xf32, #tpu.memory_space<vmem>>, %arg6: memref<1x32x128xf32, #tpu.memory_space<vmem>>) attributes {dimension_semantics = [#tpu.dimension_semantics<parallel>, #tpu.dimension_semantics<parallel>], iteration_bounds = array<i64: 1, 2>, scalar_prefetch = 0 : i64, scratch_operands = 0 : i64, tpu.core_type = #tpu.core_type<tc>, window_params = [{transform_indices = @transform_0, window_bounds = array<i64: 32, 32>}, {transform_indices = @transform_1, window_bounds = array<i64: 1, 32, 32>}, {transform_indices = @transform_2, window_bounds = array<i64: 1, 32, 128>}, {pipeline_mode = #tpu.pipeline_mode<synchronous>, transform_indices = @transform_3, window_bounds = array<i64: 1, 128>}, {transform_indices = @transform_4, window_bounds = array<i64: 1, 32, 128>}]} {
    %c0 = arith.constant 0 : index
    %c0_0 = arith.constant 0 : index
    %0 = vector.load %arg2[%c0, %c0_0] : memref<32x32xbf16, #tpu.memory_space<vmem>>, vector<32x32xbf16>
    %c0_1 = arith.constant 0 : index
    %c0_2 = arith.constant 0 : index
    %c0_3 = arith.constant 0 : index
    %1 = vector.load %arg3[%c0_1, %c0_2, %c0_3] : memref<1x32x32xbf16, #tpu.memory_space<vmem>>, vector<1x32x32xbf16>
    %2 = vector.shape_cast %1 : vector<1x32x32xbf16> to vector<32x32xbf16>
    %3 = arith.mulf %0, %2 : vector<32x32xbf16>
    %c0_4 = arith.constant 0 : index
    %c0_5 = arith.constant 0 : index
    %c0_6 = arith.constant 0 : index
    %4 = vector.load %arg4[%c0_4, %c0_5, %c0_6] : memref<1x32x128xbf16, #tpu.memory_space<vmem>>, vector<1x32x128xbf16>
    %5 = vector.shape_cast %4 : vector<1x32x128xbf16> to vector<32x128xbf16>
    %cst = arith.constant dense<0.000000e+00> : vector<32x128xf32>
    %6 = tpu.matmul %3, %5, %cst {dimension_numbers = #tpu.dot_dimension_numbers<[1], [0], [0], [1], [0, 0, 1, 1], [], []>} : vector<32x32xbf16>, vector<32x128xbf16>, vector<32x128xf32> -> vector<32x128xf32>
    %c0_7 = arith.constant 0 : index
    %c0_8 = arith.constant 0 : index
    %7 = vector.load %arg5[%c0_7, %c0_8] : memref<1x128xf32, #tpu.memory_space<vmem>>, vector<1x128xf32>
    %8 = vector.broadcast %7 : vector<1x128xf32> to vector<32x128xf32>
    %9 = arith.addf %6, %8 : vector<32x128xf32>
    %c0_9 = arith.constant 0 : index
    %c0_10 = arith.constant 0 : index
    %c0_11 = arith.constant 0 : index
    %10 = vector.load %arg6[%c0_9, %c0_10, %c0_11] : memref<1x32x128xf32, #tpu.memory_space<vmem>>, vector<1x32x128xf32>
    %11 = vector.shape_cast %10 : vector<1x32x128xf32> to vector<32x128xf32>
    %12 = vector.shape_cast %9 : vector<32x128xf32> to vector<1x32x128xf32>
    tpu.vector_store %arg6[%c0_9, %c0_10, %c0_11], %12 {strides = array<i32>} : memref<1x32x128xf32, #tpu.memory_space<vmem>>, vector<1x32x128xf32>,
    return
  }
  func.func @transform_0(%arg0: i32, %arg1: i32) -> (i32, i32) {
    %c0_i32 = arith.constant 0 : i32
    %c0_i32_0 = arith.constant 0 : i32
    return %arg0, %c0_i32 : i32, i32
  }
  func.func @transform_1(%arg0: i32, %arg1: i32) -> (i32, i32, i32) {
    %c0_i32 = arith.constant 0 : i32
    %c0_i32_0 = arith.constant 0 : i32
    return %arg1, %arg0, %c0_i32 : i32, i32, i32
  }
  func.func @transform_2(%arg0: i32, %arg1: i32) -> (i32, i32, i32) {
    %c0_i32 = arith.constant 0 : i32
    %c0_i32_0 = arith.constant 0 : i32
    %c0_i32_1 = arith.constant 0 : i32
    return %arg1, %c0_i32, %c0_i32_0 : i32, i32, i32
  }
  func.func @transform_3(%arg0: i32, %arg1: i32) -> (i32, i32) {
    %c0_i32 = arith.constant 0 : i32
    %c0_i32_0 = arith.constant 0 : i32
    %c0_i32_1 = arith.constant 0 : i32
    return %c0_i32, %c0_i32_0 : i32, i32
  }
  func.func @transform_4(%arg0: i32, %arg1: i32) -> (i32, i32, i32) {
    %c0_i32 = arith.constant 0 : i32
    %c0_i32_0 = arith.constant 0 : i32
    return %arg1, %arg0, %c0_i32 : i32, i32, i32
  }
}

</mosaic_0001>

<llo_original>
// kernel: tpu_custom_call.1
$region0: #{tpu_custom_call.1}
  #allocation0 [shape = 'u32[]', space=smem, size = 0x4, offset = 0x4, fixed_abs, tag = 'smem constant byte address 0x4 - core index']
  #allocation1 [shape = 'u32[72,128]{1,0:T(1,128)}', space=vmem, size = 0x9000, scoped, tag = 'internal scratch']
  %s0 = inlined_call_operand.hbm [shape: bf16[32,32], index: 0, kind: input, shape index: {}]
  %s1 = inlined_call_operand.hbm [shape: bf16[2,32,32], index: 1, kind: input, shape index: {}]
  %s2 = inlined_call_operand.hbm [shape: bf16[2,32,128], index: 2, kind: input, shape index: {}]
  %s3 = inlined_call_operand.vmem [shape: f32[1,128], index: 3, kind: input, shape index: {}]
  %s4 = inlined_call_operand.hbm [shape: f32[2,32,128], index: 4, kind: output, shape index: {}]
  %s5 = sld [smem:[#allocation0]]
  $region61: #{tpu_custom_call.1} parent=0
    _
  %s7 = ssub.s32 1, %s5
  %s8 = scalar_select 0, %s7, %s5
  $region1: #{tpu_custom_call.1} parent=0
    #allocation2 [shape = 'u8[8192]{0}', space=vmem, size = 0x2000, scoped, tag = 'input window, operand 0, single buffered']
    #allocation3 [shape = 's32[2]{0}', space=sflag, size = 0x8, scoped, tag = 'scoped memory for tpu_custom_call.1']
    #allocation4 [shape = 's32[2]{0}', space=sflag, size = 0x8, scoped, tag = 'scoped memory for tpu_custom_call.1']
    #allocation5 [shape = 'u8[16384]{0}', space=vmem, size = 0x4000, scoped, tag = 'input window, operand 1']
    #allocation6 [shape = 's32[2]{0}', space=sflag, size = 0x8, scoped, tag = 'scoped memory for tpu_custom_call.1']
    #allocation7 [shape = 'u8[16384]{0}', space=vmem, size = 0x4000, scoped, tag = 'input window, operand 2']
    #allocation8 [shape = 'u8[32768]{0}', space=vmem, size = 0x8000, scoped, tag = 'output window, operand 0']
    %9 = vsyncpa [#allocation3], 0
    %10 = vsyncpa [#allocation6], 0
    %s11 = scalar_lea.sflag [#allocation6], 1
    %12 = vsyncpa %s11, 0
    %13 = vsyncpa [#allocation4], 0
    %s14 = scalar_lea.sflag [#allocation4], 1
    %15 = vsyncpa %s14, 0
    loop: start=0, step=1, limit=4
    $region2: #{tpu_custom_call.1} parent=1 // loop_pre_header
      _
    $region3: #{tpu_custom_call.1} parent=1 // loop_header
      %s17 = sphi 0, %s21
      %p18 = scmp.ge.s32.totalorder %s17, 4
      %s24 = sphi 0, %s36
      %s25 = sphi 0, %s32
      %s26 = sphi 0, %s24
      %s27 = sphi 0, %s25
      %s28 = sphi 0, %s26
      %s29 = sphi 0, %s27
      %s39 = sphi 0, %s41
      %s42 = sphi 0, %s39
      %s43 = sphi 0, %s42
      %s59 = sphi 0, %s43
      %s67 = sphi 0, %s69
      %s70 = sphi 0, %s67
      %s71 = sphi 0, %s70
      %s87 = sphi 0, %s71
      %s93 = sphi 0, %s95
      %s96 = sphi 0, %s93
      %s97 = sphi 0, %s96
      %s113 = sphi 0, %s97
      %s117 = sphi 0, %s117
      %s119 = sphi 0, %s117
      %s120 = sphi 0, %s119
      %s134 = sphi 0, %s120
      %s142 = sphi 0, %s144
      %s145 = sphi 0, %s142
      %s146 = sphi 0, %s145
      %s162 = sphi 0, %s146
    $region4: #{tpu_custom_call.1} parent=1 // loop_header_branch
      %20 = sbr.rel (%p18) target = $region8
    $region5: #{tpu_custom_call.1} parent=1 // loop_body
      %s22 = ssub.s32 %s17, 1
      %s23 = ssub.s32 %s17, 2
      %s30 = sadd.s32 1, %s25
      %p31 = scmp.ge.s32.totalorder %s30, 2
      %s32 = scalar_select %p31, 0, %s30
      %s33 = sadd.s32 1, %s24
      %s34 = scalar_select %p31, %s33, %s24
      %p35 = scmp.ge.s32.totalorder %s34, 1
      %s36 = scalar_select %p35, 0, %s34
      %s37 = ssub.s32 %s24, %s36
      %p38 = scmp.eq.s32.totalorder %s37, 0
      %s40 = sadd.s32 %s39, 1
      %s41 = scalar_select %p38, %s39, %s40
      %p44 = pneg %p38
      %p45 = scmp.eq.s32.totalorder %s17, 1
      %p46 = por %p44, %p45
      %p47 = scmp.ne.s32.totalorder %s39, %s42
      %p48 = scmp.eq.s32.totalorder %s17, 0
      %p49 = por %p47, %p48
      %p50 = scmp.ne.s32.totalorder %s39, %s42
      %p51 = scmp.eq.s32.totalorder %s22, 1
      %p52 = por %p50, %p51
      %p53 = scmp.ne.s32.totalorder %s42, %s43
      %p54 = scmp.eq.s32.totalorder %s22, 0
      %p55 = por %p53, %p54
      %p56 = scmp.ne.s32.totalorder %s42, %s43
      %p57 = scmp.eq.s32.totalorder %s23, 1
      %p58 = por %p56, %p57
      %p60 = scmp.ne.s32.totalorder %s43, %s59
      %p61 = scmp.eq.s32.totalorder %s23, 0
      %p62 = por %p60, %p61
      %s63 = ssub.s32 %s25, %s32
      %s64 = ssub.s32 %s24, %s36
      %s65 = sor.u32 %s63, %s64
      %p66 = scmp.eq.s32.totalorder %s65, 0
      %s68 = sadd.s32 %s67, 1
      %s69 = scalar_select %p66, %s67, %s68
      %p72 = pneg %p66
      %p73 = scmp.eq.s32.totalorder %s17, 1
      %p74 = por %p72, %p73
      %p75 = scmp.ne.s32.totalorder %s67, %s70
      %p76 = scmp.eq.s32.totalorder %s17, 0
      %p77 = por %p75, %p76
      %p78 = scmp.ne.s32.totalorder %s67, %s70
      %p79 = scmp.eq.s32.totalorder %s22, 1
      %p80 = por %p78, %p79
      %p81 = scmp.ne.s32.totalorder %s70, %s71
      %p82 = scmp.eq.s32.totalorder %s22, 0
      %p83 = por %p81, %p82
      %p84 = scmp.ne.s32.totalorder %s70, %s71
      %p85 = scmp.eq.s32.totalorder %s23, 1
      %p86 = por %p84, %p85
      %p88 = scmp.ne.s32.totalorder %s71, %s87
      %p89 = scmp.eq.s32.totalorder %s23, 0
      %p90 = por %p88, %p89
      %s91 = ssub.s32 %s25, %s32
      %p92 = scmp.eq.s32.totalorder %s91, 0
      %s94 = sadd.s32 %s93, 1
      %s95 = scalar_select %p92, %s93, %s94
      %p98 = pneg %p92
      %p99 = scmp.eq.s32.totalorder %s17, 1
      %p100 = por %p98, %p99
      %p101 = scmp.ne.s32.totalorder %s93, %s96
      %p102 = scmp.eq.s32.totalorder %s17, 0
      %p103 = por %p101, %p102
      %p104 = scmp.ne.s32.totalorder %s93, %s96
      %p105 = scmp.eq.s32.totalorder %s22, 1
      %p106 = por %p104, %p105
      %p107 = scmp.ne.s32.totalorder %s96, %s97
      %p108 = scmp.eq.s32.totalorder %s22, 0
      %p109 = por %p107, %p108
      %p110 = scmp.ne.s32.totalorder %s96, %s97
      %p111 = scmp.eq.s32.totalorder %s23, 1
      %p112 = por %p110, %p111
      %p114 = scmp.ne.s32.totalorder %s97, %s113
      %p115 = scmp.eq.s32.totalorder %s23, 0
      %p116 = por %p114, %p115
      %s118 = sadd.s32 %s117, 1
      %p121 = scmp.eq.s32.totalorder %s17, 1
      %p122 = scmp.ne.s32.totalorder %s117, %s119
      %p123 = scmp.eq.s32.totalorder %s17, 0
      %p124 = por %p122, %p123
      %p125 = scmp.ne.s32.totalorder %s117, %s119
      %p126 = scmp.eq.s32.totalorder %s22, 1
      %p127 = por %p125, %p126
      %p128 = scmp.ne.s32.totalorder %s119, %s120
      %p129 = scmp.eq.s32.totalorder %s22, 0
      %p130 = por %p128, %p129
      %p131 = scmp.ne.s32.totalorder %s119, %s120
      %p132 = scmp.eq.s32.totalorder %s23, 1
      %p133 = por %p131, %p132
      %p135 = scmp.ne.s32.totalorder %s120, %s134
      %p136 = scmp.eq.s32.totalorder %s23, 0
      %p137 = por %p135, %p136
      %s138 = ssub.s32 %s25, %s32
      %s139 = ssub.s32 %s24, %s36
      %s140 = sor.u32 %s138, %s139
      %p141 = scmp.eq.s32.totalorder %s140, 0
      %s143 = sadd.s32 %s142, 1
      %s144 = scalar_select %p141, %s142, %s143
      %p147 = pneg %p141
      %p148 = scmp.eq.s32.totalorder %s17, 1
      %p149 = por %p147, %p148
      %p150 = scmp.ne.s32.totalorder %s142, %s145
      %p151 = scmp.eq.s32.totalorder %s17, 0
      %p152 = por %p150, %p151
      %p153 = scmp.ne.s32.totalorder %s142, %s145
      %p154 = scmp.eq.s32.totalorder %s22, 1
      %p155 = por %p153, %p154
      %p156 = scmp.ne.s32.totalorder %s145, %s146
      %p157 = scmp.eq.s32.totalorder %s22, 0
      %p158 = por %p156, %p157
      %p159 = scmp.ne.s32.totalorder %s145, %s146
      %p160 = scmp.eq.s32.totalorder %s23, 1
      %p161 = por %p159, %p160
      %p163 = scmp.ne.s32.totalorder %s146, %s162
      %p164 = scmp.eq.s32.totalorder %s23, 0
      %p165 = por %p163, %p164
      %p166 = scmp.le.s32.totalorder 1, %s17
      %p167 = scmp.lt.s32.totalorder %s17, 3
      %p168 = pnand %p166, %p167
      %p169 = pneg %p168
      // Predicated region
      $region9: #{tpu_custom_call.1} parent=5 // pred_check
        _
      $region10: #{tpu_custom_call.1} parent=5 // pred_check_branch
        %171 = sbr.rel (%p168) target = $region12
      $region11: #{tpu_custom_call.1} parent=5 // pred_region
        %s172 = ssub.s32 %s17, 1
        // Predicated region
        $region13: #{tpu_custom_call.1} parent=11 // pred_check
          %p173 = pneg %p55
        $region14: #{tpu_custom_call.1} parent=11 // pred_check_branch
          %175 = sbr.rel (%p173) target = $region16
        $region15: #{tpu_custom_call.1} parent=11 // pred_region
          %s176 = smul.u32 4, %s26
          %178 = vsyncadd [#allocation3], 0
          %s179 = smul.addr %s176, 4
          %s180 = scalar_lea.hbm %s0, %s179
          %s181 = sshll.u32 %s180, 4
          %s182 = int_to_ptr.hbm [resolvable:$true] %s181
          %s183 = sshll.u32 [#allocation2], 4
          %s184 = int_to_ptr.vmem [resolvable:$true] %s183
          %189 = dma.hbm_to_vmem [thread:$0]  %s182, 256, %s184, [#allocation3], 64, 64, 4
        $region16: #{tpu_custom_call.1} parent=11 // pred_fallthru
          _
        // Predicated region
        $region17: #{tpu_custom_call.1} parent=11 // pred_check
          %p190 = pneg %p130
        $region18: #{tpu_custom_call.1} parent=11 // pred_check_branch
          %192 = sbr.rel (%p190) target = $region20
        $region19: #{tpu_custom_call.1} parent=11 // pred_region
          _
        $region20: #{tpu_custom_call.1} parent=11 // pred_fallthru
          _
      $region12: #{tpu_custom_call.1} parent=5 // pred_fallthru
        _
      %p193 = scmp.lt.s32.totalorder %s17, 2
      // Predicated region
      $region21: #{tpu_custom_call.1} parent=5 // pred_check
        %p194 = pneg %p193
      $region22: #{tpu_custom_call.1} parent=5 // pred_check_branch
        %196 = sbr.rel (%p194) target = $region24
      $region23: #{tpu_custom_call.1} parent=5 // pred_region
        // Predicated region
        $region25: #{tpu_custom_call.1} parent=23 // pred_check
          %p197 = pneg %p77
        $region26: #{tpu_custom_call.1} parent=23 // pred_check_branch
          %199 = sbr.rel (%p197) target = $region28
        $region27: #{tpu_custom_call.1} parent=23 // pred_region
          %s200 = sand.u32 %s17, 1
          %s201 = scalar_lea.sflag [#allocation6], %s200
          %s202 = sand.u32 %s67, 1
          %s203 = smul.addr %s202, 16
          %s204 = scalar_lea.vmem [#allocation5], %s203
          %s205 = smul.u32 4, %s24
          %207 = vsyncadd %s201, 0
          %s208 = smul.addr %s25, 4
          %s209 = sadd.s32 %s205, %s208
          %s210 = smul.addr %s209, 4
          %s211 = scalar_lea.hbm %s1, %s210
          %s212 = sshll.u32 %s211, 4
          %s213 = int_to_ptr.hbm [resolvable:$true] %s212
          %s214 = sshll.u32 %s204, 4
          %s215 = int_to_ptr.vmem [resolvable:$true] %s214
          %220 = dma.hbm_to_vmem [thread:$0]  %s213, 256, %s215, %s201, 64, 64, 4
        $region28: #{tpu_custom_call.1} parent=23 // pred_fallthru
          _
        // Predicated region
        $region29: #{tpu_custom_call.1} parent=23 // pred_check
          %p221 = pneg %p103
        $region30: #{tpu_custom_call.1} parent=23 // pred_check_branch
          %223 = sbr.rel (%p221) target = $region32
        $region31: #{tpu_custom_call.1} parent=23 // pred_region
          %s224 = sand.u32 %s17, 1
          %s225 = scalar_lea.sflag [#allocation6], %s224
          %s226 = sand.u32 %s93, 1
          %s227 = smul.addr %s226, 16
          %s228 = scalar_lea.vmem [#allocation7], %s227
          %230 = vsyncadd %s225, 0
          %s231 = smul.addr %s25, 4
          %s232 = smul.addr %s231, 4
          %s233 = scalar_lea.hbm %s2, %s232
          %s234 = sshll.u32 %s233, 4
          %s235 = int_to_ptr.hbm [resolvable:$true] %s234
          %s236 = sshll.u32 %s228, 4
          %s237 = int_to_ptr.vmem [resolvable:$true] %s236
          %242 = dma.hbm_to_vmem [thread:$0]  %s235, 256, %s237, %s225, 64, 64, 4
        $region32: #{tpu_custom_call.1} parent=23 // pred_fallthru
          _
      $region24: #{tpu_custom_call.1} parent=5 // pred_fallthru
        _
      %p243 = scmp.le.s32.totalorder 1, %s17
      %p244 = scmp.lt.s32.totalorder %s17, 3
      %p245 = pnand %p243, %p244
      %p246 = pneg %p245
      // Predicated region
      $region33: #{tpu_custom_call.1} parent=5 // pred_check
        _
      $region34: #{tpu_custom_call.1} parent=5 // pred_check_branch
        %248 = sbr.rel (%p245) target = $region36
      $region35: #{tpu_custom_call.1} parent=5 // pred_region
        %s249 = ssub.s32 %s17, 1
        // Predicated region
        $region37: #{tpu_custom_call.1} parent=35 // pred_check
          %p250 = pneg %p55
        $region38: #{tpu_custom_call.1} parent=35 // pred_check_branch
          %252 = sbr.rel (%p250) target = $region40
        $region39: #{tpu_custom_call.1} parent=35 // pred_region
          %254 = dma.done [#allocation3], 256
        $region40: #{tpu_custom_call.1} parent=35 // pred_fallthru
          _
        %s255 = sand.u32 %s22, 1
        %s256 = scalar_lea.sflag [#allocation6], %s255
        %s257 = sand.u32 %s70, 1
        %s258 = smul.addr %s257, 16
        %s259 = scalar_lea.vmem [#allocation5], %s258
        // Predicated region
        $region41: #{tpu_custom_call.1} parent=35 // pred_check
          %p260 = pneg %p83
        $region42: #{tpu_custom_call.1} parent=35 // pred_check_branch
          %262 = sbr.rel (%p260) target = $region44
        $region43: #{tpu_custom_call.1} parent=35 // pred_region
          %264 = dma.done %s256, 256
        $region44: #{tpu_custom_call.1} parent=35 // pred_fallthru
          _
        %s265 = sand.u32 %s22, 1
        %s266 = scalar_lea.sflag [#allocation6], %s265
        %s267 = sand.u32 %s96, 1
        %s268 = smul.addr %s267, 16
        %s269 = scalar_lea.vmem [#allocation7], %s268
        // Predicated region
        $region45: #{tpu_custom_call.1} parent=35 // pred_check
          %p270 = pneg %p109
        $region46: #{tpu_custom_call.1} parent=35 // pred_check_branch
          %272 = sbr.rel (%p270) target = $region48
        $region47: #{tpu_custom_call.1} parent=35 // pred_region
          %274 = dma.done %s266, 256
        $region48: #{tpu_custom_call.1} parent=35 // pred_fallthru
          _
        %p275 = pneg %p55
        %p276 = pneg %p52
        %s277 = sand.u32 %s22, 1
        %s278 = scalar_lea.sflag [#allocation6], %s277
        %s279 = sand.u32 %s70, 1
        %s280 = smul.addr %s279, 16
        %s281 = scalar_lea.vmem [#allocation5], %s280
        %p282 = pneg %p83
        %p283 = pneg %p80
        %s284 = sand.u32 %s22, 1
        %s285 = scalar_lea.sflag [#allocation6], %s284
        %s286 = sand.u32 %s96, 1
        %s287 = smul.addr %s286, 16
        %s288 = scalar_lea.vmem [#allocation7], %s287
        %p289 = pneg %p109
        %p290 = pneg %p106
        %p291 = pneg %p130
        %p292 = pneg %p127
        %p293 = pneg %p158
        %p294 = pneg %p155
        %s295 = sand.u32 %s145, 1
        %s296 = scalar_lea.sflag [#allocation4], %s295
        %s297 = sand.u32 %s145, 1
        %s298 = smul.addr %s297, 32
        %s299 = scalar_lea.vmem [#allocation8], %s298
        %s300 = smul.u32 4, %s26
        %s301 = smul.u32 4, %s26
        %s302 = smul.u32 4, %s26
        %v304 = vld [vmem:[#allocation2] sm:$0xf]
        %v305 = vld [vmem:[#allocation2 + $0x4] sm:$0xf]
        %v306 = vld [vmem:[#allocation2 + $0x8] sm:$0xf]
        %v307 = vld [vmem:[#allocation2 + $0xc] sm:$0xf]
        %v308 = vld [vmem:[%s259] sm:$0xf]
        %v309 = vld [vmem:[%s259 + $0x4] sm:$0xf]
        %v310 = vld [vmem:[%s259 + $0x8] sm:$0xf]
        %v311 = vld [vmem:[%s259 + $0xc] sm:$0xf]
        %v312 = vunpack.c.l.bf16 %v304
        %v313 = vunpack.c.l.bf16 %v305
        %v314 = vunpack.c.l.bf16 %v306
        %v315 = vunpack.c.l.bf16 %v307
        %v316 = vunpack.c.l.bf16 %v308
        %v317 = vunpack.c.l.bf16 %v309
        %v318 = vunpack.c.l.bf16 %v310
        %v319 = vunpack.c.l.bf16 %v311
        %v320 = vmul.f32 %v312, %v316
        %v321 = vmul.f32 %v313, %v317
        %v322 = vmul.f32 %v314, %v318
        %v323 = vmul.f32 %v315, %v319
        %v324 = vpack.c.bf16 %v321, %v320
        %v325 = vpack.c.bf16 %v323, %v322
        %v326 = vld [vmem:[%s269] sm:$0xf]
        %v327 = vld [vmem:[%s269 + $0x4] sm:$0xf]
        %v328 = vld [vmem:[%s269 + $0x8] sm:$0xf]
        %v329 = vld [vmem:[%s269 + $0xc] sm:$0xf]
        %v330 = vld [vmem:[%s3] sm:$0x1]
        %v332 = vperm.slane %v330, 0
        %v338 = vunpack.c.l.b16 %v326
        %v339 = vunpack.c.l.b16 %v327
        %v340 = vunpack.c.l.b16 %v328
        %v341 = vunpack.c.l.b16 %v329
        %v342 = vpack.c.b16 %v339, %v338
        %v343 = vpack.c.b16 %v341, %v340
        %vm346 = vcmask 261120
        %v348 = vsel %vm346, %v324, 0
        %v351 = vsel %vm346, %v325, 0
        %353 = vmatpush.bf16.msra.mxu0 0
        %354 = vmatpush.bf16.msra.mxu0 0
        %355 = vmatpush.bf16.msra.mxu0 0
        %356 = vmatpush.bf16.msra.mxu0 0
        %357 = vmatpush.bf16.msra.mxu0 0
        %358 = vmatpush.bf16.msra.mxu0 0
        %359 = vmatpush.bf16.msra.mxu0 %v343
        %360 = vmatpush.bf16.msra.mxu0 %v342
        %361 = vmatmul.bf16.gmra.mxu0 %v348
        %v362 = vpop.f32.mrf.mxu0
        %v363 = vadd.f32 %v332, %v362
        %v364 = vpop.f32.mrf.mxu0
        %v365 = vadd.f32 %v332, %v364
        %366 = vmatmul.bf16.gmra.mxu0 %v351
        %v367 = vpop.f32.mrf.mxu0
        %v368 = vadd.f32 %v332, %v367
        %v369 = vpop.f32.mrf.mxu0
        %v370 = vadd.f32 %v332, %v369
        %371 = vdwg.mxu0
        %372 = vst [vmem:[%s299] sm:$0xff] %v363
        %373 = vst [vmem:[%s299 + $0x8] sm:$0xff] %v365
        %374 = vst [vmem:[%s299 + $0x10] sm:$0xff] %v368
        %375 = vst [vmem:[%s299 + $0x18] sm:$0xff] %v370
        %s376 = sand.u32 %s145, 1
        %s377 = scalar_lea.sflag [#allocation4], %s376
        %s378 = sand.u32 %s145, 1
        %s379 = smul.addr %s378, 32
        %s380 = scalar_lea.vmem [#allocation8], %s379
        // Predicated region
        $region49: #{tpu_custom_call.1} parent=35 // pred_check
          %p381 = pneg %p155
        $region50: #{tpu_custom_call.1} parent=35 // pred_check_branch
          %383 = sbr.rel (%p381) target = $region52
        $region51: #{tpu_custom_call.1} parent=35 // pred_region
          %s384 = smul.u32 4, %s26
          %386 = vsyncadd %s377, 0
          %s387 = smul.addr %s27, 4
          %s388 = sadd.s32 %s384, %s387
          %s389 = smul.addr %s388, 8
          %s390 = scalar_lea.hbm %s4, %s389
          %s391 = sshll.u32 %s380, 4
          %s392 = int_to_ptr.vmem [resolvable:$true] %s391
          %s393 = sshll.u32 %s390, 4
          %s394 = int_to_ptr.hbm [resolvable:$true] %s393
          %399 = dma.vmem_to_hbm [thread:$0]  %s392, 512, %s394, %s377, 128, 128, 8
        $region52: #{tpu_custom_call.1} parent=35 // pred_fallthru
          _
      $region36: #{tpu_custom_call.1} parent=5 // pred_fallthru
        _
      %p400 = scmp.le.s32.totalorder 2, %s17
      // Predicated region
      $region53: #{tpu_custom_call.1} parent=5 // pred_check
        %p401 = pneg %p400
      $region54: #{tpu_custom_call.1} parent=5 // pred_check_branch
        %403 = sbr.rel (%p401) target = $region56
      $region55: #{tpu_custom_call.1} parent=5 // pred_region
        %s404 = ssub.s32 %s17, 2
        // Predicated region
        $region57: #{tpu_custom_call.1} parent=55 // pred_check
          %p405 = pneg %p161
        $region58: #{tpu_custom_call.1} parent=55 // pred_check_branch
          %407 = sbr.rel (%p405) target = $region60
        $region59: #{tpu_custom_call.1} parent=55 // pred_region
          %s408 = sand.u32 %s146, 1
          %s409 = scalar_lea.sflag [#allocation4], %s408
          %s410 = sand.u32 %s146, 1
          %s411 = smul.addr %s410, 32
          %s412 = scalar_lea.vmem [#allocation8], %s411
          %414 = dma.done %s409, 512
        $region60: #{tpu_custom_call.1} parent=55 // pred_fallthru
          _
      $region56: #{tpu_custom_call.1} parent=5 // pred_fallthru
        _
    $region6: #{tpu_custom_call.1} parent=1 // loop_footer
      %s21 = sadd.s32 1, %s17
    $region7: #{tpu_custom_call.1} parent=1 // loop_footer_branch
      %16 = sbr.rel target = $region3
    $region8: #{tpu_custom_call.1} parent=1 // loop_exit
      _
    %415 = vsyncpa [#allocation3], 1
    %s416 = scalar_lea.sflag [#allocation3], 1
    %417 = vsyncpa %s416, 1
    %418 = vsyncpa [#allocation6], 1
    %s419 = scalar_lea.sflag [#allocation6], 1
    %420 = vsyncpa %s419, 1
    %421 = vsyncpa [#allocation4], 1
    %s422 = scalar_lea.sflag [#allocation4], 1
    %423 = vsyncpa %s422, 1

</llo_original>
